<compile_context>
chip_gen: v5e
topology: v5e:2x2
jax: 0.10.0
libtpu: 0.0.40
codegen_flags: <defaults>
</compile_context>

<pallas_src>
import numpy as np

import jax
import jax.numpy as jnp
from jax.experimental import pallas as pl
from jax.experimental.pallas import tpu as pltpu


LANE = 128                      # TPU lane width: feature axis padded for lane-dense MXU output.
_FUSED_VMEM_CAP = 40 << 20      # cap on the fused kernel's VMEM-resident footprint (v7x-safe).


# ---------------------------------------------------------------------------
# Fused Pallas kernel: W_c linear  ->  bottom-up child sums  ->  per-batch max
# ---------------------------------------------------------------------------
def _tree_encode_kernel(child_ref, parent_ref, mrow_ref, mslot_ref, cnt_ref,  # SMEM (prefetch)
                        x_ref, w_ref, b_ref, init_ref,                        # VMEM inputs
                        out_ref,                                              # VMEM output
                        vals_ref):                                            # VMEM scratch
    # (1) W_c over every node row of every tree level: one MXU dot (f32),
    #     bias epilogue.  Rows for -1 / padding tokens have x == 0, so they
    #     get exactly the bias — matching torch's index_copy into zeros.
    vals_ref[...] = (
        jnp.dot(x_ref[...], w_ref[...], preferred_element_type=jnp.float32)
        + b_ref[...]
    )

    n_edges = cnt_ref[0]
    n_max = cnt_ref[1]

    # (2) Bottom-up child sums: value[parent] += value[child], edges ordered
    #     deepest level first (the recursion's only true data dependency).
    #     Serial dynamic-row adds on the VMEM-resident values buffer — no HBM
    #     round trips, no per-depth XLA scatter kernels, no recompiles.
    def edge_body(i, carry):
        @pl.when(i < n_edges)          # padded (pow2-bucketed) entries are skipped
        def _():
            c = child_ref[i]
            p = parent_ref[i]
            vals_ref[pl.ds(p, 1), :] = (
                vals_ref[pl.ds(p, 1), :] + vals_ref[pl.ds(c, 1), :]
            )
        return carry

    jax.lax.fori_loop(0, child_ref.shape[0], edge_body, 0)

    # (3) torch.max(node_list, 0)[0]: running per-batch max over every
    #     (row, batch-slot) pair.  `init` encodes the zero batch_node rows of
    #     levels where a slot is absent (0) vs. slots present at every level
    #     (-inf, always overwritten by at least one real row).
    out_ref[...] = init_ref[...]

    def max_body(i, carry):
        @pl.when(i < n_max)
        def _():
            r = mrow_ref[i]
            s = mslot_ref[i]
            out_ref[pl.ds(s, 1), :] = jnp.maximum(
                out_ref[pl.ds(s, 1), :], vals_ref[pl.ds(r, 1), :]
            )
        return carry

    jax.lax.fori_loop(0, mrow_ref.shape[0], max_body, 0)


def tree_encode_fused(x_rows, w, b, init, child_rows, parent_rows,
                      max_rows, max_slots, counts, *, vmem_limit_bytes):
    """One pallas_call computing the whole BatchTreeEncoder forward on-chip."""
    R_pad, D = x_rows.shape
    E_pad = w.shape[1]
    B_pad = init.shape[0]

    grid_spec = pltpu.PrefetchScalarGridSpec(
        num_scalar_prefetch=5,          # edge / max index lists + live counts -> SMEM
        grid=(1,),
        in_specs=[
            pl.BlockSpec((R_pad, D), lambda i, *_: (0, 0)),      # gathered embeddings
            pl.BlockSpec((D, E_pad), lambda i, *_: (0, 0)),      # W_c (lane-padded)
            pl.BlockSpec((1, E_pad), lambda i, *_: (0, 0)),      # bias
            pl.BlockSpec((B_pad, E_pad), lambda i, *_: (0, 0)),  # per-slot max init
        ],
        out_specs=pl.BlockSpec((B_pad, E_pad), lambda i, *_: (0, 0)),
        scratch_shapes=[pltpu.VMEM((R_pad, E_pad), jnp.float32)],  # resident `values`
    )
    return pl.pallas_call(
        _tree_encode_kernel,
        out_shape=jax.ShapeDtypeStruct((B_pad, E_pad), jnp.float32),
        grid_spec=grid_spec,
        compiler_params=pltpu.CompilerParams(
            dimension_semantics=("arbitrary",),
            vmem_limit_bytes=int(vmem_limit_bytes),
        ),
    )(child_rows, parent_rows, max_rows, max_slots, counts,
      x_rows, w, b, init)


# ---------------------------------------------------------------------------
# Symbolic traversal plan (pure Python bookkeeping, zero tensor dispatches)
# ---------------------------------------------------------------------------
class _TreePlan:
    """Records the traverse_mul recursion structure without any tensor ops."""

    def __init__(self):
        self.tokens = []     # per flat row: token id or -1
        self.batch_ids = []  # per flat row: batch slot or -1
        self.parents = []    # per flat row: flat id of parent row, or -1
        self.depths = []     # per flat row: recursion depth
        self.levels = []     # node_list (post-)order: list of flat-row-id lists

    def build(self, node, batch_index, parent_rows=None, depth=0):
        size = len(node)
        if not size:
            return
        batch_index = list(batch_index)
        row_ids = []
        children_index, children = [], []
        for i in range(size):
            fid = len(self.tokens)
            row_ids.append(fid)
            if node[i][0] != -1:
                self.tokens.append(node[i][0])
                temp = node[i][1:]
                for j in range(len(temp)):
                    if temp[j][0] != -1:
                        if len(children_index) <= j:
                            children_index.append([i])
                            children.append([temp[j]])
                        else:
                            children_index[j].append(i)
                            children[j].append(temp[j])
            else:
                self.tokens.append(-1)
                batch_index[i] = -1
            self.batch_ids.append(batch_index[i])
            self.parents.append(-1 if parent_rows is None else parent_rows[i])
            self.depths.append(depth)
        # Children are appended to node_list BEFORE this level (post-order),
        # exactly like the PyTorch recursion.
        for c in range(len(children)):
            child_parents = [row_ids[i] for i in children_index[c]]
            child_batch = [batch_index[i] for i in children_index[c]]
            self.build(children[c], child_batch, child_parents, depth + 1)
        self.levels.append(row_ids)


def _round_up(n, m):
    return ((n + m - 1) // m) * m


def _bucket_pow2(n, lo=8):
    # Power-of-two bucketing -> small, cacheable set of compiled shapes.
    return max(lo, int(pl.next_power_of_2(int(n))))


def _f32_vmem_bytes(rows, cols):
    # f32 VMEM layout pads to (8, 128) tiles.
    return ((int(rows) + 7) // 8) * 8 * ((int(cols) + 127) // 128) * 128 * 4


# ---------------------------------------------------------------------------
# BatchTreeEncoder forward
# ---------------------------------------------------------------------------
class BatchTreeEncoder:
    def __init__(self, vocab_size, embedding_dim, encode_dim, batch_size, key):
        # PyTorch's index_copy of embeddings into an encode_dim-wide buffer
        # implicitly requires embedding_dim == encode_dim.
        assert embedding_dim == encode_dim
        self.vocab_size = vocab_size
        self.embedding_dim = embedding_dim
        self.encode_dim = encode_dim
        self.batch_size = batch_size
        self.e_pad = _round_up(max(encode_dim, LANE), LANE)

        k0, k1, k2, k3, k4, k5, k6 = jax.random.split(key, 7)
        s = 0.1
        self.embedding = s * jax.random.normal(k0, (vocab_size, embedding_dim), jnp.float32)
        # nn.Linear(embedding_dim, encode_dim): stored pre-transposed (in, out).
        self.W_c_w = s * jax.random.normal(k1, (embedding_dim, encode_dim), jnp.float32)
        self.W_c_b = s * jax.random.normal(k2, (1, encode_dim), jnp.float32)
        # W_l / W_r exist in __init__ but are unused by forward().
        self.W_l_w = s * jax.random.normal(k3, (encode_dim, encode_dim), jnp.float32)
        self.W_l_b = s * jax.random.normal(k4, (1, encode_dim), jnp.float32)
        self.W_r_w = s * jax.random.normal(k5, (encode_dim, encode_dim), jnp.float32)
        self.W_r_b = s * jax.random.normal(k6, (1, encode_dim), jnp.float32)

        # Embedding table with an appended zero row: -1 / padding tokens gather it,
        # so their W_c output is exactly the bias (index_copy-into-zeros semantics).
        self.embedding_ext = jnp.concatenate(
            [self.embedding, jnp.zeros((1, embedding_dim), jnp.float32)], axis=0)

        # Kernel-ready W_c: feature axis padded to 128 lanes, kept in f32
        # (review: avoid bf16 cast error compounding through the child sums).
        w_pad = jnp.zeros((embedding_dim, self.e_pad), jnp.float32)
        self.W_c_w_pad = w_pad.at[:, :encode_dim].set(self.W_c_w)
        b_pad = jnp.zeros((1, self.e_pad), jnp.float32)
        self.W_c_b_pad = b_pad.at[:, :encode_dim].set(self.W_c_b)

    def forward(self, x, bs):
        self.batch_size = bs

        # 1) Symbolic traversal (host bookkeeping only — no tensor op per level).
        plan = _TreePlan()
        plan.build(x, list(range(bs)))
        if not plan.levels:
            raise ValueError("empty input tree (torch.stack over empty node_list)")

        R = len(plan.tokens)
        L = len(plan.levels)
        R_pad = _bucket_pow2(R)
        B_pad = _round_up(max(bs, 8), 8)

        tokens_np = np.asarray(plan.tokens, np.int32)
        depths = np.asarray(plan.depths, np.int32)
        parents = np.asarray(plan.parents, np.int32)

        tok_idx = np.full((R_pad,), self.vocab_size, np.int32)      # pad / -1 -> zero row
        tok_idx[:R] = np.where(tokens_np >= 0, tokens_np, self.vocab_size)

        # 2) child -> parent edges, deepest level first: each child's subtree sum
        #    is complete before it is pushed into its parent (matches recursion).
        order = np.argsort(-depths, kind="stable")
        keep = parents[order] != -1
        child_rows = order[keep].astype(np.int32)
        parent_rows = parents[child_rows].astype(np.int32)
        n_edges = int(child_rows.size)

        # 3) (row, batch-slot) pairs feeding the final max (node_list index_copy rows).
        mrows, mslots = [], []
        for lvl_rows in plan.levels:
            for fid in lvl_rows:
                b_id = plan.batch_ids[fid]
                if b_id != -1:
                    mrows.append(fid)
                    mslots.append(b_id)
        n_max = len(mrows)

        E_b = _bucket_pow2(max(n_edges, 1))
        M_b = _bucket_pow2(max(n_max, 1))
        child_pad = np.zeros((E_b,), np.int32);  child_pad[:n_edges] = child_rows
        parent_pad = np.zeros((E_b,), np.int32); parent_pad[:n_edges] = parent_rows
        mrow_pad = np.zeros((M_b,), np.int32);   mrow_pad[:n_max] = np.asarray(mrows, np.int32)
        mslot_pad = np.zeros((M_b,), np.int32);  mslot_pad[:n_max] = np.asarray(mslots, np.int32)
        counts = np.asarray([n_edges, n_max], np.int32)

        # 4) torch stack/max semantics: a slot absent from any level sees that
        #    level's zero batch_node row -> its running max starts at 0; a slot
        #    present at every level starts at -inf (always overwritten).
        present = np.zeros((bs,), np.int64)
        for lvl_rows in plan.levels:
            for s_ in {plan.batch_ids[fid] for fid in lvl_rows if plan.batch_ids[fid] != -1}:
                present[s_] += 1
        init_np = np.zeros((B_pad, self.e_pad), np.float32)
        for s_ in range(bs):
            if present[s_] == L:
                init_np[s_, : self.encode_dim] = -np.inf

        # 5) ONE embedding gather for all levels / rows.
        # TODO(synk): this gather could be pulled into the kernel via per-row DMA
        # from an HBM-resident embedding table (PrefetchScalarGridSpec + make_async_copy).
        x_rows = jnp.take(self.embedding_ext, jnp.asarray(tok_idx), axis=0)

        # 6) Fused Pallas kernel, provided the VMEM-resident footprint fits every
        #    TPU generation (v7x has 64 MiB per TensorCore).
        resident = (2 * _f32_vmem_bytes(R_pad, self.embedding_dim)       # x (double-buffered)
                    + 2 * _f32_vmem_bytes(self.embedding_dim, self.e_pad)
                    + 2 * _f32_vmem_bytes(1, self.e_pad)
                    + 4 * _f32_vmem_bytes(B_pad, self.e_pad)              # init + out
                    + 2 * _f32_vmem_bytes(R_pad, self.e_pad))             # values scratch + dot temp
        if resident <= _FUSED_VMEM_CAP:
            out = tree_encode_fused(
                x_rows, self.W_c_w_pad, self.W_c_b_pad, jnp.asarray(init_np),
                jnp.asarray(child_pad), jnp.asarray(parent_pad),
                jnp.asarray(mrow_pad), jnp.asarray(mslot_pad), jnp.asarray(counts),
                vmem_limit_bytes=min(max(resident + (8 << 20), 32 << 20), 48 << 20),
            )
            return out[:bs, : self.encode_dim]

        # Fallback for trees whose resident footprint would not fit a v7x core.
        # TODO(synk): replace with a tiled two-pass Pallas scheme (streamed W_c +
        # per-depth DMA-gathered child sums) for >VMEM trees.
        values = x_rows @ self.W_c_w + self.W_c_b
        max_depth = int(depths.max()) if R else 0
        for d in range(max_depth, 0, -1):
            rows = np.nonzero(depths == d)[0].astype(np.int32)
            if rows.size:
                values = values.at[jnp.asarray(parents[rows])].add(values[jnp.asarray(rows)])
        out = jnp.asarray(init_np[:bs, : self.encode_dim])
        if n_max:
            out = out.at[jnp.asarray(mslot_pad[:n_max])].max(
                values[jnp.asarray(mrow_pad[:n_max]), : self.encode_dim])
        return out


# ---------------------------------------------------------------------------
# Pure-numpy reference mirroring the PyTorch recursion literally (f32).
# ---------------------------------------------------------------------------
def reference_forward(x, bs, embedding, w, b, encode_dim):
    embedding = np.asarray(embedding)
    w = np.asarray(w)
    b = np.asarray(b)
    node_list = []

    def traverse(node, batch_index):
        size = len(node)
        if not size:
            return None
        batch_index = list(batch_index)
        index, children_index = [], []
        current_node, children = [], []
        for i in range(size):
            if node[i][0] != -1:
                index.append(i)
                current_node.append(node[i][0])
                temp = node[i][1:]
                for j in range(len(temp)):
                    if temp[j][0] != -1:
                        if len(children_index) <= j:
                            children_index.append([i])
                            children.append([temp[j]])
                        else:
                            children_index[j].append(i)
                            children[j].append(temp[j])
            else:
                batch_index[i] = -1
        base = np.zeros((size, embedding.shape[1]), np.float32)
        if index:
            base[np.asarray(index)] = embedding[np.asarray(current_node)]
        batch_current = base @ w + b
        for c in range(len(children)):
            bc = [batch_index[i] for i in children_index[c]]
            tree = traverse(children[c], bc)
            if tree is not None:
                z = np.zeros((size, encode_dim), np.float32)
                z[np.asarray(children_index[c])] = tree
                batch_current = batch_current + z
        level = np.zeros((bs, encode_dim), np.float32)
        keep = [i for i in range(size) if batch_index[i] != -1]
        if keep:
            level[np.asarray([batch_index[i] for i in keep])] = batch_current[np.asarray(keep)]
        node_list.append(level)
        return batch_current

    traverse(x, list(range(bs)))
    return np.stack(node_list, 0).max(0)


# ---------------------------------------------------------------------------
if __name__ == "__main__":
    VOCAB, EMB, ENC, BS = 40, 32, 32, 2

    key = jax.random.PRNGKey(0)
    enc = BatchTreeEncoder(VOCAB, EMB, ENC, BS, key)

    # Synthetic batch of 2 trees: each node is [token_id, child_tree, ...]
    tree0 = [3, [5, [7]], [2]]
    tree1 = [1, [4], [6, [8], [9]]]
    x = [tree0, tree1]

    out = jax.block_until_ready(enc.forward(x, BS))
    assert out.shape == (BS, ENC), out.shape

    ref = reference_forward(x, BS, enc.embedding, enc.W_c_w, enc.W_c_b, ENC)
    max_err = float(np.abs(np.asarray(out) - ref).max())
    assert np.allclose(np.asarray(out), ref, atol=1e-2, rtol=1e-2), max_err

    print("KERNEL_OK")
</pallas_src>

<mosaic_0001>
module attributes {stable_mosaic.version = 11 : i64} {
  func.func @_tree_encode_kernel(%arg0: i32, %arg1: memref<8xi32, #tpu.memory_space<smem>>, %arg2: memref<8xi32, #tpu.memory_space<smem>>, %arg3: memref<16xi32, #tpu.memory_space<smem>>, %arg4: memref<16xi32, #tpu.memory_space<smem>>, %arg5: memref<2xi32, #tpu.memory_space<smem>>, %arg6: memref<16x32xf32, #tpu.memory_space<vmem>>, %arg7: memref<32x128xf32, #tpu.memory_space<vmem>>, %arg8: memref<1x128xf32, #tpu.memory_space<vmem>>, %arg9: memref<8x128xf32, #tpu.memory_space<vmem>>, %arg10: memref<8x128xf32, #tpu.memory_space<vmem>>, %arg11: memref<16x128xf32, #tpu.memory_space<vmem>>) attributes {dimension_semantics = [#tpu.dimension_semantics<arbitrary>], iteration_bounds = array<i64: 1>, scalar_prefetch = 5 : i64, scratch_operands = 1 : i64, tpu.core_type = #tpu.core_type<tc>, window_params = [{pipeline_mode = #tpu.pipeline_mode<synchronous>, transform_indices = @transform_0, window_bounds = array<i64: 16, 32>}, {pipeline_mode = #tpu.pipeline_mode<synchronous>, transform_indices = @transform_1, window_bounds = array<i64: 32, 128>}, {pipeline_mode = #tpu.pipeline_mode<synchronous>, transform_indices = @transform_2, window_bounds = array<i64: 1, 128>}, {pipeline_mode = #tpu.pipeline_mode<synchronous>, transform_indices = @transform_3, window_bounds = array<i64: 8, 128>}, {pipeline_mode = #tpu.pipeline_mode<synchronous>, transform_indices = @transform_4, window_bounds = array<i64: 8, 128>}]} {
    %c0 = arith.constant 0 : index
    %c0_0 = arith.constant 0 : index
    %0 = vector.load %arg6[%c0, %c0_0] : memref<16x32xf32, #tpu.memory_space<vmem>>, vector<16x32xf32>
    %c0_1 = arith.constant 0 : index
    %c0_2 = arith.constant 0 : index
    %1 = vector.load %arg7[%c0_1, %c0_2] : memref<32x128xf32, #tpu.memory_space<vmem>>, vector<32x128xf32>
    %cst = arith.constant dense<0.000000e+00> : vector<16x128xf32>
    %2 = tpu.matmul %0, %1, %cst {dimension_numbers = #tpu.dot_dimension_numbers<[1], [0], [0], [1], [0, 0, 1, 1], [], []>} : vector<16x32xf32>, vector<32x128xf32>, vector<16x128xf32> -> vector<16x128xf32>
    %c0_3 = arith.constant 0 : index
    %c0_4 = arith.constant 0 : index
    %3 = vector.load %arg8[%c0_3, %c0_4] : memref<1x128xf32, #tpu.memory_space<vmem>>, vector<1x128xf32>
    %4 = vector.broadcast %3 : vector<1x128xf32> to vector<16x128xf32>
    %5 = arith.addf %2, %4 : vector<16x128xf32>
    %c0_5 = arith.constant 0 : index
    %c0_6 = arith.constant 0 : index
    %6 = vector.load %arg11[%c0_5, %c0_6] : memref<16x128xf32, #tpu.memory_space<vmem>>, vector<16x128xf32>
    tpu.vector_store %arg11[%c0_5, %c0_6], %5 {strides = array<i32>} : memref<16x128xf32, #tpu.memory_space<vmem>>, vector<16x128xf32>,
    %c0_7 = arith.constant 0 : index
    %7 = memref.load %arg5[%c0_7] : memref<2xi32, #tpu.memory_space<smem>>
    %c1 = arith.constant 1 : index
    %8 = memref.load %arg5[%c1] : memref<2xi32, #tpu.memory_space<smem>>
    %c0_i32 = arith.constant 0 : i32
    %c8_i32 = arith.constant 8 : i32
    %9 = arith.addi %c0_i32, %c8_i32 : i32
    %c1_i32 = arith.constant 1 : i32
    scf.for %arg12 = %c0_i32 to %9 step %c1_i32  : i32 {
      %13 = arith.cmpi slt, %arg12, %7 : i32
      %14 = arith.extui %13 : i1 to i32
      %c0_i32_16 = arith.constant 0 : i32
      %15 = arith.cmpi ne, %14, %c0_i32_16 : i32
      scf.if %15 {
        %16 = arith.index_cast %arg12 : i32 to index
        %17 = memref.load %arg1[%16] : memref<8xi32, #tpu.memory_space<smem>>
        %18 = arith.index_cast %arg12 : i32 to index
        %19 = memref.load %arg2[%18] : memref<8xi32, #tpu.memory_space<smem>>
        %20 = arith.index_cast %19 : i32 to index
        %c0_17 = arith.constant 0 : index
        %21 = vector.load %arg11[%20, %c0_17] : memref<16x128xf32, #tpu.memory_space<vmem>>, vector<1x128xf32>
        %22 = arith.index_cast %17 : i32 to index
        %c0_18 = arith.constant 0 : index
        %23 = vector.load %arg11[%22, %c0_18] : memref<16x128xf32, #tpu.memory_space<vmem>>, vector<1x128xf32>
        %24 = arith.addf %21, %23 : vector<1x128xf32>
        %25 = arith.index_cast %19 : i32 to index
        %c0_19 = arith.constant 0 : index
        %26 = vector.load %arg11[%25, %c0_19] : memref<16x128xf32, #tpu.memory_space<vmem>>, vector<1x128xf32>
        tpu.vector_store %arg11[%25, %c0_19], %24 {strides = array<i32>} : memref<16x128xf32, #tpu.memory_space<vmem>>, vector<1x128xf32>,
      } else {
      }
    }
    %c8_i32_8 = arith.constant 8 : i32
    %c0_9 = arith.constant 0 : index
    %c0_10 = arith.constant 0 : index
    %10 = vector.load %arg9[%c0_9, %c0_10] : memref<8x128xf32, #tpu.memory_space<vmem>>, vector<8x128xf32>
    %c0_11 = arith.constant 0 : index
    %c0_12 = arith.constant 0 : index
    %11 = vector.load %arg10[%c0_11, %c0_12] : memref<8x128xf32, #tpu.memory_space<vmem>>, vector<8x128xf32>
    tpu.vector_store %arg10[%c0_11, %c0_12], %10 {strides = array<i32>} : memref<8x128xf32, #tpu.memory_space<vmem>>, vector<8x128xf32>,
    %c0_i32_13 = arith.constant 0 : i32
    %c16_i32 = arith.constant 16 : i32
    %12 = arith.addi %c0_i32_13, %c16_i32 : i32
    %c1_i32_14 = arith.constant 1 : i32
    scf.for %arg12 = %c0_i32_13 to %12 step %c1_i32_14  : i32 {
      %13 = arith.cmpi slt, %arg12, %8 : i32
      %14 = arith.extui %13 : i1 to i32
      %c0_i32_16 = arith.constant 0 : i32
      %15 = arith.cmpi ne, %14, %c0_i32_16 : i32
      scf.if %15 {
        %16 = arith.index_cast %arg12 : i32 to index
        %17 = memref.load %arg3[%16] : memref<16xi32, #tpu.memory_space<smem>>
        %18 = arith.index_cast %arg12 : i32 to index
        %19 = memref.load %arg4[%18] : memref<16xi32, #tpu.memory_space<smem>>
        %20 = arith.index_cast %19 : i32 to index
        %c0_17 = arith.constant 0 : index
        %21 = vector.load %arg10[%20, %c0_17] : memref<8x128xf32, #tpu.memory_space<vmem>>, vector<1x128xf32>
        %22 = arith.index_cast %17 : i32 to index
        %c0_18 = arith.constant 0 : index
        %23 = vector.load %arg11[%22, %c0_18] : memref<16x128xf32, #tpu.memory_space<vmem>>, vector<1x128xf32>
        %24 = arith.maximumf %21, %23 : vector<1x128xf32>
        %25 = arith.index_cast %19 : i32 to index
        %c0_19 = arith.constant 0 : index
        %26 = vector.load %arg10[%25, %c0_19] : memref<8x128xf32, #tpu.memory_space<vmem>>, vector<1x128xf32>
        tpu.vector_store %arg10[%25, %c0_19], %24 {strides = array<i32>} : memref<8x128xf32, #tpu.memory_space<vmem>>, vector<1x128xf32>,
      } else {
      }
    }
    %c16_i32_15 = arith.constant 16 : i32
    return
  }
  func.func @transform_0(%arg0: i32, %arg1: memref<8xi32, #tpu.memory_space<smem>>, %arg2: memref<8xi32, #tpu.memory_space<smem>>, %arg3: memref<16xi32, #tpu.memory_space<smem>>, %arg4: memref<16xi32, #tpu.memory_space<smem>>, %arg5: memref<2xi32, #tpu.memory_space<smem>>) -> (i32, i32) {
    %c0_i32 = arith.constant 0 : i32
    %c0_i32_0 = arith.constant 0 : i32
    %c0_i32_1 = arith.constant 0 : i32
    return %c0_i32, %c0_i32_0 : i32, i32
  }
  func.func @transform_1(%arg0: i32, %arg1: memref<8xi32, #tpu.memory_space<smem>>, %arg2: memref<8xi32, #tpu.memory_space<smem>>, %arg3: memref<16xi32, #tpu.memory_space<smem>>, %arg4: memref<16xi32, #tpu.memory_space<smem>>, %arg5: memref<2xi32, #tpu.memory_space<smem>>) -> (i32, i32) {
    %c0_i32 = arith.constant 0 : i32
    %c0_i32_0 = arith.constant 0 : i32
    %c0_i32_1 = arith.constant 0 : i32
    return %c0_i32, %c0_i32_0 : i32, i32
  }
  func.func @transform_2(%arg0: i32, %arg1: memref<8xi32, #tpu.memory_space<smem>>, %arg2: memref<8xi32, #tpu.memory_space<smem>>, %arg3: memref<16xi32, #tpu.memory_space<smem>>, %arg4: memref<16xi32, #tpu.memory_space<smem>>, %arg5: memref<2xi32, #tpu.memory_space<smem>>) -> (i32, i32) {
    %c0_i32 = arith.constant 0 : i32
    %c0_i32_0 = arith.constant 0 : i32
    %c0_i32_1 = arith.constant 0 : i32
    return %c0_i32, %c0_i32_0 : i32, i32
  }
  func.func @transform_3(%arg0: i32, %arg1: memref<8xi32, #tpu.memory_space<smem>>, %arg2: memref<8xi32, #tpu.memory_space<smem>>, %arg3: memref<16xi32, #tpu.memory_space<smem>>, %arg4: memref<16xi32, #tpu.memory_space<smem>>, %arg5: memref<2xi32, #tpu.memory_space<smem>>) -> (i32, i32) {
    %c0_i32 = arith.constant 0 : i32
    %c0_i32_0 = arith.constant 0 : i32
    %c0_i32_1 = arith.constant 0 : i32
    return %c0_i32, %c0_i32_0 : i32, i32
  }
  func.func @transform_4(%arg0: i32, %arg1: memref<8xi32, #tpu.memory_space<smem>>, %arg2: memref<8xi32, #tpu.memory_space<smem>>, %arg3: memref<16xi32, #tpu.memory_space<smem>>, %arg4: memref<16xi32, #tpu.memory_space<smem>>, %arg5: memref<2xi32, #tpu.memory_space<smem>>) -> (i32, i32) {
    %c0_i32 = arith.constant 0 : i32
    %c0_i32_0 = arith.constant 0 : i32
    %c0_i32_1 = arith.constant 0 : i32
    return %c0_i32, %c0_i32_0 : i32, i32
  }
}

</mosaic_0001>

<llo_original>
// kernel: tpu_custom_call.1
$region0: #{tpu_custom_call.1}
  #allocation0 [shape = 'u32[]', space=smem, size = 0x4, offset = 0x4, fixed_abs, tag = 'smem constant byte address 0x4 - core index']
  #allocation1 [shape = 'u32[72,128]{1,0:T(1,128)}', space=vmem, size = 0x9000, scoped, tag = 'internal scratch']
  #allocation2 [shape = 'f32[16,128]{1,0:T(8,128)}', space=vmem, size = 0x2000, scoped, tag = 'scratch operand']
  #allocation3 [shape = 's32[1]{0}', space=sflag, size = 0x4, scoped, tag = 'scoped memory for tpu_custom_call.1']
  #allocation4 [shape = 'u8[512]{0}', space=smem, size = 0x200, scoped, tag = 'prefetched SMEM operand 0']
  #allocation5 [shape = 'u8[512]{0}', space=smem, size = 0x200, scoped, tag = 'prefetched SMEM operand 1']
  #allocation6 [shape = 'u8[512]{0}', space=smem, size = 0x200, scoped, tag = 'prefetched SMEM operand 2']
  #allocation7 [shape = 'u8[512]{0}', space=smem, size = 0x200, scoped, tag = 'prefetched SMEM operand 3']
  #allocation8 [shape = 'u8[512]{0}', space=smem, size = 0x200, scoped, tag = 'prefetched SMEM operand 4']
  %s0 = inlined_call_operand.hbm [shape: s32[8], index: 0, kind: input, shape index: {}]
  %s1 = inlined_call_operand.hbm [shape: s32[8], index: 1, kind: input, shape index: {}]
  %s2 = inlined_call_operand.vmem [shape: s32[16], index: 2, kind: input, shape index: {}]
  %s3 = inlined_call_operand.vmem [shape: s32[16], index: 3, kind: input, shape index: {}]
  %s4 = inlined_call_operand.vmem [shape: s32[2], index: 4, kind: input, shape index: {}]
  %s5 = inlined_call_operand.hbm [shape: f32[16,32], index: 5, kind: input, shape index: {}]
  %s6 = inlined_call_operand.hbm [shape: f32[32,128], index: 6, kind: input, shape index: {}]
  %s7 = inlined_call_operand.vmem [shape: f32[1,128], index: 7, kind: input, shape index: {}]
  %s8 = inlined_call_operand.hbm [shape: f32[8,128], index: 8, kind: input, shape index: {}]
  %s9 = inlined_call_operand.hbm [shape: f32[8,128], index: 9, kind: output, shape index: {}]
  %s10 = sld [smem:[#allocation0]]
  $region60: #{tpu_custom_call.1} parent=0
    _
  %s12 = ssub.s32 1, %s10
  %s13 = scalar_select 0, %s12, %s10
  %s15 = sshll.u32 %s0, 4
  %s16 = int_to_ptr.hbm [resolvable:$true] %s15
  %18 = dma.hbm_to_smem %s16, 16, [#allocation4], [#allocation3]
  %s20 = sshll.u32 %s1, 4
  %s21 = int_to_ptr.hbm [resolvable:$true] %s20
  %23 = dma.hbm_to_smem %s21, 16, [#allocation5], [#allocation3]
  %s25 = sshll.u32 %s2, 4
  %s26 = int_to_ptr.vmem [resolvable:$true] %s25
  %28 = dma.vmem_to_smem %s26, 16, [#allocation6], [#allocation3]
  %s30 = sshll.u32 %s3, 4
  %s31 = int_to_ptr.vmem [resolvable:$true] %s30
  %33 = dma.vmem_to_smem %s31, 16, [#allocation7], [#allocation3]
  %s35 = sshll.u32 %s4, 4
  %s36 = int_to_ptr.vmem [resolvable:$true] %s35
  %38 = dma.vmem_to_smem %s36, 16, [#allocation8], [#allocation3]
  %40 = dma.done [#allocation3], 80
  %41 = sfence
  $region1: #{tpu_custom_call.1} parent=0
    #allocation9 [shape = 'u8[8192]{0}', space=vmem, size = 0x2000, scoped, tag = 'input window, operand 5, single buffered']
    #allocation10 [shape = 's32[1]{0}', space=sflag, size = 0x4, scoped, tag = 'scoped memory for tpu_custom_call.1']
    #allocation11 [shape = 's32[1]{0}', space=sflag, size = 0x4, scoped, tag = 'scoped memory for tpu_custom_call.1']
    #allocation12 [shape = 'u8[16384]{0}', space=vmem, size = 0x4000, scoped, tag = 'input window, operand 6, single buffered']
    #allocation13 [shape = 's32[1]{0}', space=sflag, size = 0x4, scoped, tag = 'scoped memory for tpu_custom_call.1']
    #allocation14 [shape = 'u8[4096]{0}', space=vmem, size = 0x1000, scoped, tag = 'input window, operand 8, single buffered']
    #allocation15 [shape = 'u8[4096]{0}', space=vmem, size = 0x1000, scoped, tag = 'output window, operand 0, single buffered']
    %42 = vsyncpa [#allocation10], 0
    %43 = vsyncpa [#allocation13], 0
    %44 = vsyncpa [#allocation11], 0
    // Predicated region
    $region2: #{tpu_custom_call.1} parent=1 // pred_check
      _
    $region3: #{tpu_custom_call.1} parent=1 // pred_check_branch
      %46 = sbr.rel (0) target = $region5
    $region4: #{tpu_custom_call.1} parent=1 // pred_region
      %48 = vsyncadd [#allocation10], 0
      %s49 = sshll.u32 %s5, 4
      %s50 = int_to_ptr.hbm [resolvable:$true] %s49
      %s51 = sshll.u32 [#allocation9], 4
      %s52 = int_to_ptr.vmem [resolvable:$true] %s51
      %57 = dma.hbm_to_vmem [thread:$0]  %s50, 256, %s52, [#allocation10], 128, 128, 8
    $region5: #{tpu_custom_call.1} parent=1 // pred_fallthru
      _
    // Predicated region
    $region6: #{tpu_custom_call.1} parent=1 // pred_check
      _
    $region7: #{tpu_custom_call.1} parent=1 // pred_check_branch
      %59 = sbr.rel (0) target = $region9
    $region8: #{tpu_custom_call.1} parent=1 // pred_region
      %61 = vsyncadd [#allocation13], 0
      %s62 = sshll.u32 %s6, 4
      %s63 = int_to_ptr.hbm [resolvable:$true] %s62
      %s64 = sshll.u32 [#allocation12], 4
      %s65 = int_to_ptr.vmem [resolvable:$true] %s64
      %70 = dma.hbm_to_vmem [thread:$0]  %s63, 512, %s65, [#allocation13], 128, 128, 8
    $region9: #{tpu_custom_call.1} parent=1 // pred_fallthru
      _
    // Predicated region
    $region10: #{tpu_custom_call.1} parent=1 // pred_check
      _
    $region11: #{tpu_custom_call.1} parent=1 // pred_check_branch
      %72 = sbr.rel (0) target = $region13
    $region12: #{tpu_custom_call.1} parent=1 // pred_region
      _
    $region13: #{tpu_custom_call.1} parent=1 // pred_fallthru
      _
    // Predicated region
    $region14: #{tpu_custom_call.1} parent=1 // pred_check
      _
    $region15: #{tpu_custom_call.1} parent=1 // pred_check_branch
      %74 = sbr.rel (0) target = $region17
    $region16: #{tpu_custom_call.1} parent=1 // pred_region
      %76 = vsyncadd [#allocation13], 0
      %s78 = sshll.u32 %s8, 4
      %s79 = int_to_ptr.hbm [resolvable:$true] %s78
      %s80 = sshll.u32 [#allocation14], 4
      %s81 = int_to_ptr.vmem [resolvable:$true] %s80
      %83 = dma.hbm_to_vmem [thread:$0]  %s79, 128, %s81, [#allocation13]
    $region17: #{tpu_custom_call.1} parent=1 // pred_fallthru
      _
    // Predicated region
    $region18: #{tpu_custom_call.1} parent=1 // pred_check
      _
    $region19: #{tpu_custom_call.1} parent=1 // pred_check_branch
      %85 = sbr.rel (0) target = $region21
    $region20: #{tpu_custom_call.1} parent=1 // pred_region
      %87 = dma.done [#allocation10], 256
    $region21: #{tpu_custom_call.1} parent=1 // pred_fallthru
      _
    // Predicated region
    $region22: #{tpu_custom_call.1} parent=1 // pred_check
      _
    $region23: #{tpu_custom_call.1} parent=1 // pred_check_branch
      %89 = sbr.rel (0) target = $region25
    $region24: #{tpu_custom_call.1} parent=1 // pred_region
      %91 = dma.done [#allocation13], 512
    $region25: #{tpu_custom_call.1} parent=1 // pred_fallthru
      _
    // Predicated region
    $region26: #{tpu_custom_call.1} parent=1 // pred_check
      _
    $region27: #{tpu_custom_call.1} parent=1 // pred_check_branch
      %93 = sbr.rel (0) target = $region29
    $region28: #{tpu_custom_call.1} parent=1 // pred_region
      %95 = dma.done [#allocation13], 128
    $region29: #{tpu_custom_call.1} parent=1 // pred_fallthru
      _
    %v96 = vld [vmem:[#allocation9] sm:$0xff]
    %v97 = vld [vmem:[#allocation9 + $0x8] sm:$0xff]
    %v98 = vld [vmem:[#allocation12] sm:$0xff]
    %v99 = vld [vmem:[#allocation12 + $0x8] sm:$0xff]
    %v100 = vld [vmem:[#allocation12 + $0x10] sm:$0xff]
    %v101 = vld [vmem:[#allocation12 + $0x18] sm:$0xff]
    %v102 = vld [vmem:[%s7] sm:$0x1]
    %v104 = vperm.slane %v102, 0
    %vm106 = vcmask 261120
    %v108 = vsel %vm106, %v96, 0
    %v111 = vsel %vm106, %v97, 0
    %113 = vmatpush.msra.mxu0 0.0
    %114 = vmatpush.msra.mxu0 0.0
    %115 = vmatpush.msra.mxu0 0.0
    %116 = vmatpush.msra.mxu0 0.0
    %117 = vmatpush.msra.mxu0 0.0
    %118 = vmatpush.msra.mxu0 0.0
    %119 = vmatpush.msra.mxu0 0.0
    %120 = vmatpush.msra.mxu0 0.0
    %121 = vmatpush.msra.mxu0 0.0
    %122 = vmatpush.msra.mxu0 0.0
    %123 = vmatpush.msra.mxu0 0.0
    %124 = vmatpush.msra.mxu0 0.0
    %125 = vmatpush.msra.mxu0 %v101
    %126 = vmatpush.msra.mxu0 %v100
    %127 = vmatpush.msra.mxu0 %v99
    %128 = vmatpush.msra.mxu0 %v98
    %129 = vmatmul.f32.gmra.mxu0 %v108
    %v130 = vpop.f32.mrf.mxu0
    %v131 = vadd.f32 %v104, %v130
    %132 = vmatmul.f32.gmra.mxu0 %v111
    %v133 = vpop.f32.mrf.mxu0
    %v134 = vadd.f32 %v104, %v133
    %135 = vdwg.mxu0
    %136 = vst [vmem:[#allocation2] sm:$0xff] %v131
    %137 = vst [vmem:[#allocation2 + $0x8] sm:$0xff] %v134
    %s138 = sld [smem:[#allocation8]]
    %s139 = sld [smem:[#allocation8 + $0x1]]
    loop: start=0, step=1, limit=8
    $region30: #{tpu_custom_call.1} parent=1 // loop_pre_header
      _
    $region31: #{tpu_custom_call.1} parent=1 // loop_header
      %s141 = sphi 0, %s145
      %p142 = scmp.ge.s32.totalorder %s141, 8
    $region32: #{tpu_custom_call.1} parent=1 // loop_header_branch
      %144 = sbr.rel (%p142) target = $region36
    $region33: #{tpu_custom_call.1} parent=1 // loop_body
      %p146 = scmp.lt.s32.totalorder %s141, %s138
      // Predicated region
      $region37: #{tpu_custom_call.1} parent=33 // pred_check
        %p147 = pneg %p146
      $region38: #{tpu_custom_call.1} parent=33 // pred_check_branch
        %149 = sbr.rel (%p147) target = $region40
      $region39: #{tpu_custom_call.1} parent=33 // pred_region
        %s150 = sld [smem:[#allocation4 + %s141]]
        %s151 = sld [smem:[#allocation5 + %s141]]
        %s152 = scalar_lea.vmem [#allocation2], %s151
        %v153 = vld [vmem:[%s152] sm:$0x1]
        %s154 = scalar_lea.vmem [#allocation2], %s150
        %v155 = vld [vmem:[%s154] sm:$0x1]
        %v156 = vadd.f32 %v153, %v155
        %157 = vst [vmem:[%s152] sm:$0x1] %v156
      $region40: #{tpu_custom_call.1} parent=33 // pred_fallthru
        _
    $region34: #{tpu_custom_call.1} parent=1 // loop_footer
      %s145 = sadd.s32 1, %s141
    $region35: #{tpu_custom_call.1} parent=1 // loop_footer_branch
      %140 = sbr.rel target = $region31
    $region36: #{tpu_custom_call.1} parent=1 // loop_exit
      _
    %v158 = vld [vmem:[#allocation14] sm:$0xff]
    %159 = vst [vmem:[#allocation15] sm:$0xff] %v158
    loop: start=0, step=1, limit=16
    $region41: #{tpu_custom_call.1} parent=1 // loop_pre_header
      _
    $region42: #{tpu_custom_call.1} parent=1 // loop_header
      %s161 = sphi 0, %s165
      %p162 = scmp.ge.s32.totalorder %s161, 16
    $region43: #{tpu_custom_call.1} parent=1 // loop_header_branch
      %164 = sbr.rel (%p162) target = $region47
    $region44: #{tpu_custom_call.1} parent=1 // loop_body
      %p166 = scmp.lt.s32.totalorder %s161, %s139
      // Predicated region
      $region48: #{tpu_custom_call.1} parent=44 // pred_check
        %p167 = pneg %p166
      $region49: #{tpu_custom_call.1} parent=44 // pred_check_branch
        %169 = sbr.rel (%p167) target = $region51
      $region50: #{tpu_custom_call.1} parent=44 // pred_region
        %s170 = sld [smem:[#allocation6 + %s161]]
        %s171 = sld [smem:[#allocation7 + %s161]]
        %s172 = scalar_lea.vmem [#allocation15], %s171
        %v173 = vld [vmem:[%s172] sm:$0x1]
        %s174 = scalar_lea.vmem [#allocation2], %s170
        %v175 = vld [vmem:[%s174] sm:$0x1]
        %v176 = vmax.f32 %v173, %v175
        %177 = vst [vmem:[%s172] sm:$0x1] %v176
      $region51: #{tpu_custom_call.1} parent=44 // pred_fallthru
        _
    $region45: #{tpu_custom_call.1} parent=1 // loop_footer
      %s165 = sadd.s32 1, %s161
    $region46: #{tpu_custom_call.1} parent=1 // loop_footer_branch
      %160 = sbr.rel target = $region42
    $region47: #{tpu_custom_call.1} parent=1 // loop_exit
      _
    // Predicated region
    $region52: #{tpu_custom_call.1} parent=1 // pred_check
      _
    $region53: #{tpu_custom_call.1} parent=1 // pred_check_branch
      %179 = sbr.rel (0) target = $region55
    $region54: #{tpu_custom_call.1} parent=1 // pred_region
      %181 = vsyncadd [#allocation11], 0
      %s183 = sshll.u32 [#allocation15], 4
      %s184 = int_to_ptr.vmem [resolvable:$true] %s183
      %s185 = sshll.u32 %s9, 4
      %s186 = int_to_ptr.hbm [resolvable:$true] %s185
      %188 = dma.vmem_to_hbm [thread:$0]  %s184, 128, %s186, [#allocation11]
    $region55: #{tpu_custom_call.1} parent=1 // pred_fallthru
      _
    // Predicated region
    $region56: #{tpu_custom_call.1} parent=1 // pred_check
      _
    $region57: #{tpu_custom_call.1} parent=1 // pred_check_branch
      %190 = sbr.rel (0) target = $region59
    $region58: #{tpu_custom_call.1} parent=1 // pred_region
      %192 = dma.done [#allocation11], 128
    $region59: #{tpu_custom_call.1} parent=1 // pred_fallthru
      _
    %193 = vsyncpa [#allocation10], 1
    %194 = vsyncpa [#allocation13], 1
    %195 = vsyncpa [#allocation11], 1

</llo_original>
